<compile_context>
chip_gen: v7x
topology: tpu7x:2x2x1
jax: 0.10.0
libtpu: 0.0.40
codegen_flags: <defaults>
</compile_context>

<pallas_src>
import math
import numpy as np
import jax
import jax.numpy as jnp
from jax import lax
from jax.experimental import pallas as pl
from jax.experimental.pallas import tpu as pltpu

# ----------------------- NeuroScribe default hyper-params -----------------------
STATE_INDEX = np.arange(1)                 # len(state_index) == 1
DIM = int(len(STATE_INDEX))                # dof per trajectory
# TODO(synk): DIM > 1 needs basis-weight interleaving + s broadcast across dofs;
# the module default (state_index = arange(1)) gives DIM == 1, which is handled.
N_BASIS = 5                                # N
T_SEG = 10                                 # T
L_SUB = 10                                 # l
TAU = 1.0
DT = 1.0 / (T_SEG * L_SUB)                 # 0.01
TIME_STEPS = int(round(TAU / DT)) + 1      # 101 rows (initial + 100 Euler steps)
A_Z = 25.0
A_X = 1.0
N_CHANNELS = 5                             # MergedModel n_channels
WINDOW = 384                               # MergedModel input_window_size
FEAT_DIM = 404                             # MergedModel n_classes (full feature width)
N_USED = DIM * (N_BASIS + 1)               # feature cols consumed by DMP (goal + basis w)
N_OUT_PAD = 8                              # pruned head rows (7 live + 1 pad), sublane aligned
DY0_INIT = 0.01

# Euler-step coefficients (chain-shortened form)
DT_TAU = DT / TAU
A_COEF = 1.0 - A_Z * DT_TAU                # 0.75
CDT = A_Z * (A_Z / 4.0) * DT_TAU           # 1.5625

# Rollout blocking: row 0 + 7 prologue steps (aligned 8-row store), then
# fori_loop over 8-step blocks (aligned 8-row stores), then a short tail.
PRO_STEPS = 7
NBLK = (TIME_STEPS - 1 - PRO_STEPS) // 8             # 11
EPI_STEPS = TIME_STEPS - 1 - PRO_STEPS - NBLK * 8    # 5

# DMPParameters basis constants (deterministic, init-time)
_C_BASIS = np.exp(-A_X * np.linspace(0.0, 1.0, N_BASIS)).astype(np.float32)
_SIGMA2 = (np.ones(N_BASIS) * N_BASIS ** 1.5 / _C_BASIS / A_X).astype(np.float32)

# Closed-form phase variable: x_{i+1} = x_i * (1 - A_X*DT/TAU), so the forcing-term
# basis weighting is a (TIME_STEPS-1, N_BASIS) table known at init time.
_X_VALS = (1.0 - A_X * DT / TAU) ** np.arange(1, TIME_STEPS)          # (100,)
_PSI = np.exp(-0.5 * (_X_VALS[:, None] - _C_BASIS[None, :]) ** 2
              / _SIGMA2[None, :])                                      # (100, N)
_COEF = (_X_VALS[:, None] * _PSI / _PSI.sum(axis=1, keepdims=True)
         ).astype(np.float32)                                          # (100, N)


# ----------------------- LQTController (init-time, faithful) --------------------
def lqt_gains(state_dim, control_dim, dt, T):
    A1d = np.zeros((3, 3))
    for i in range(3):
        A1d = A1d + np.diag(np.ones(3 - i), i) * dt ** i / math.factorial(i)
    A = np.kron(A1d, np.eye(control_dim))
    B1d = np.zeros((3, 1))
    for i in range(3):
        B1d[2 - i, 0] = dt ** (i + 1) / math.factorial(i + 1)
    B = np.kron(B1d, np.eye(control_dim))
    Q = np.eye(state_dim) * 1e-6
    Q[-2:, -2:] = np.eye(2)
    R = np.eye(control_dim) * 1e-9
    K = np.zeros((T, control_dim, state_dim))
    P = np.eye(state_dim)
    for t in range(T - 1, -1, -1):
        K[t] = np.linalg.inv(R + B.T @ P @ B) @ B.T @ P @ A
        P = Q + A.T @ P @ A - A.T @ P @ B @ K[t]
    return A, B, K


# TODO(synk): the custom DMPIntegrator that couples these LQT gains into the rollout
# is not in the provided source; gains are computed for init-fidelity but unused below.
_A_LQT, _B_LQT, _K_LQT = lqt_gains(DIM * 3, DIM, DT, T_SEG)


# ----------------------- Fused forward kernel -----------------------------------
# TODO(synk): MergedModel ("TSFEEGNet") architecture is not provided in the source;
# it is replaced by a deterministic linear projection (flattened EEG -> 404 feats).
# The L(404 -> 1) head and the feature-column selection are folded into the same
# (pruned, transposed) weight matrix at init time.
def _neuroscribe_kernel(x_ref, w_ref, b_ref, coef_ref, y0_ref, y_ref, g_ref):
    # ---- fused feature extractor + L head (only the 7 consumed outputs) ----
    # x is cast to bf16 in-kernel (no separate XLA cast pass over x in HBM).
    x_bf = x_ref[...].astype(jnp.bfloat16)                         # (B, K)
    feat_t = lax.dot_general(                                      # (N_OUT_PAD, B) f32
        w_ref[...], x_bf,
        dimension_numbers=(((1,), (1,)), ((), ())),                # contract K with K
        preferred_element_type=jnp.float32) + b_ref[...]

    goal = feat_t[0:DIM, :]                                        # (1, BD)
    w_nb = feat_t[DIM:N_USED, :]                                   # (N, BD)
    s = feat_t[N_USED:N_USED + 1, :]                               # (1, BD) == L(feat)
    # TODO(synk): exact use of `s` inside the custom DMPIntegrator is not in the
    # provided source; here it scales the forcing term (as before).

    y0 = y0_ref[...]                                               # (1, BD)
    z = jnp.full_like(y0, DY0_INIT * TAU)                          # z0 = dy0 * tau

    # ---- forcing term for ALL steps: one tiny matmul + one vectorized FMA ----
    force = jnp.dot(coef_ref[...], w_nb,
                    preferred_element_type=jnp.float32)            # (T-1, BD)
    scale = (goal - y0) * s * DT_TAU
    g_ref[...] = force * scale + CDT * goal                        # G_i = cdt*goal + dt/tau*f_i

    # ---- Euler rollout (y only; dy/ddy are discarded by the module, not built) ----
    def step(yv, zv, gi):
        # tuple RHS uses OLD (yv, zv): ~3-op dependent chain on z, 2 on y
        return yv + DT_TAU * zv, A_COEF * zv - CDT * yv + gi

    y = y0
    rows = [y0]
    for i in range(PRO_STEPS):                                     # rows 1..7
        y, z = step(y, z, g_ref[i:i + 1, :])
        rows.append(y)
    y_ref[0:PRO_STEPS + 1, :] = jnp.concatenate(rows, axis=0)      # aligned 8-row store

    def body(blk, carry):
        yb, zb = carry
        row0 = pl.multiple_of(8 + blk * 8, 8)
        g_blk = g_ref[pl.ds(row0 - 1, 8), :]                       # steps row0-1 .. row0+6
        rws = []
        for j in range(8):
            yb, zb = step(yb, zb, g_blk[j:j + 1, :])
            rws.append(yb)
        y_ref[pl.ds(row0, 8), :] = jnp.concatenate(rws, axis=0)    # aligned 8-row store
        return yb, zb

    y, z = lax.fori_loop(0, NBLK, body, (y, z))

    if EPI_STEPS:                                                  # tail rows 96..100
        rows = []
        for i in range(PRO_STEPS + NBLK * 8, TIME_STEPS - 1):
            y, z = step(y, z, g_ref[i:i + 1, :])
            rows.append(y)
        y_ref[PRO_STEPS + 1 + NBLK * 8:TIME_STEPS, :] = jnp.concatenate(rows, axis=0)


def fused_forward(x_flat, w_t, b_t, coef, y0_row):
    BD = y0_row.shape[1]
    vmem = pl.BlockSpec(memory_space=pltpu.MemorySpace.VMEM)
    return pl.pallas_call(
        _neuroscribe_kernel,
        out_shape=jax.ShapeDtypeStruct((TIME_STEPS, BD), jnp.float32),
        in_specs=[vmem] * 5,
        out_specs=vmem,
        scratch_shapes=[pltpu.VMEM((TIME_STEPS - 1, BD), jnp.float32)],
        compiler_params=pltpu.CompilerParams(vmem_limit_bytes=32 * 1024 * 1024),
    )(x_flat, w_t, b_t, coef, y0_row)


# ----------------------- Params & full forward (glue in plain JAX) --------------
def init_params(key):
    k1, k2 = jax.random.split(key)
    w_feat = (jax.random.normal(k1, (N_CHANNELS * WINDOW, FEAT_DIM), jnp.float32)
              * 0.02)
    b_feat = jnp.full((1, FEAT_DIM), 0.1, jnp.float32)
    w_l = (jax.random.normal(k2, (FEAT_DIM, 1), jnp.float32)
           * (1.0 / math.sqrt(FEAT_DIM)))
    b_l = jnp.zeros((1, 1), jnp.float32)

    # Dead-column pruning + L fusion: only feat[:, :N_USED] (goal + basis weights)
    # and s = L(feat) are consumed downstream.  L is linear, so it becomes one
    # extra output column (still a function of all 404 features).  405 -> 7 live
    # outputs, sublane-padded to 8, stored TRANSPOSED (outputs on sublanes) so the
    # fused kernel feeds the DMP without any in-kernel transpose.
    w_small = jnp.concatenate([w_feat[:, :N_USED], w_feat @ w_l], axis=1)       # (K, 7)
    b_small = jnp.concatenate([b_feat[:, :N_USED], b_feat @ w_l + b_l], axis=1)  # (1, 7)
    pad = N_OUT_PAD - (N_USED + 1)
    w_t = jnp.pad(w_small, ((0, 0), (0, pad))).T                                 # (8, K)
    b_t = jnp.pad(b_small, ((0, 0), (0, pad))).T                                 # (8, 1)
    return dict(w_t=w_t.astype(jnp.bfloat16),           # bf16 MXU path
                b_t=b_t.astype(jnp.float32),
                coef=jnp.asarray(_COEF))                 # (T-1, N) forcing table


def neuroscribe_forward(params, x, y0):
    B = x.shape[0]
    x_flat = x.reshape(B, -1)                                   # (B, C*W) f32 (cast in-kernel)
    # y0.reshape(-1, 1)[:, 0] -> row-major flatten (batch-major, dof-minor)
    y0_row = y0.reshape(1, B * DIM).astype(jnp.float32)         # (1, BD)

    Y = fused_forward(x_flat, params["w_t"], params["b_t"],
                      params["coef"], y0_row)                   # (TIME_STEPS, BD)

    # y.view(B, dim, -1).transpose(2, 1)  ->  (B, time_steps, dim)
    return jnp.transpose(Y.reshape(TIME_STEPS, B, DIM), (1, 0, 2))


if __name__ == "__main__":
    key = jax.random.PRNGKey(0)
    kx, ky, kp = jax.random.split(key, 3)

    B = 2
    x = jax.random.normal(kx, (B, N_CHANNELS, WINDOW), jnp.float32)   # EEG input
    y0 = jax.random.normal(ky, (B, DIM), jnp.float32)                 # start state

    params = init_params(kp)
    fwd = jax.jit(neuroscribe_forward)
    out = fwd(params, x, y0)
    out = jax.block_until_ready(out)

    assert out.shape == (B, TIME_STEPS, DIM), out.shape
    assert bool(jnp.all(jnp.isfinite(out)))
    print("KERNEL_OK")
</pallas_src>

<mosaic_0001>
module attributes {stable_mosaic.version = 11 : i64} {
  func.func @_neuroscribe_kernel(%arg0: memref<2x1920xf32, #tpu.memory_space<vmem>>, %arg1: memref<8x1920xbf16, #tpu.memory_space<vmem>>, %arg2: memref<8x1xf32, #tpu.memory_space<vmem>>, %arg3: memref<100x5xf32, #tpu.memory_space<vmem>>, %arg4: memref<1x2xf32, #tpu.memory_space<vmem>>, %arg5: memref<101x2xf32, #tpu.memory_space<vmem>>, %arg6: memref<100x2xf32, #tpu.memory_space<vmem>>) attributes {dimension_semantics = [], scalar_prefetch = 0 : i64, scratch_operands = 1 : i64, tpu.core_type = #tpu.core_type<tc>} {
    %c0 = arith.constant 0 : index
    %c0_0 = arith.constant 0 : index
    %0 = vector.load %arg0[%c0, %c0_0] : memref<2x1920xf32, #tpu.memory_space<vmem>>, vector<2x1920xf32>
    %1 = arith.truncf %0 : vector<2x1920xf32> to vector<2x1920xbf16>
    %c0_1 = arith.constant 0 : index
    %c0_2 = arith.constant 0 : index
    %2 = vector.load %arg1[%c0_1, %c0_2] : memref<8x1920xbf16, #tpu.memory_space<vmem>>, vector<8x1920xbf16>
    %cst = arith.constant dense<0.000000e+00> : vector<8x2xf32>
    %3 = tpu.matmul %2, %1, %cst {dimension_numbers = #tpu.dot_dimension_numbers<[1], [1], [0], [0], [0, 0, 1, 0], [], []>} : vector<8x1920xbf16>, vector<2x1920xbf16>, vector<8x2xf32> -> vector<8x2xf32>
    %c0_3 = arith.constant 0 : index
    %c0_4 = arith.constant 0 : index
    %4 = vector.load %arg2[%c0_3, %c0_4] : memref<8x1xf32, #tpu.memory_space<vmem>>, vector<8x1xf32>
    %5 = vector.broadcast %4 : vector<8x1xf32> to vector<8x2xf32>
    %6 = arith.addf %3, %5 : vector<8x2xf32>
    %7 = vector.extract_strided_slice %6 {offsets = [0, 0], sizes = [1, 2], strides = [1, 1]} : vector<8x2xf32> to vector<1x2xf32>
    %8 = vector.extract_strided_slice %6 {offsets = [1, 0], sizes = [5, 2], strides = [1, 1]} : vector<8x2xf32> to vector<5x2xf32>
    %9 = vector.extract_strided_slice %6 {offsets = [6, 0], sizes = [1, 2], strides = [1, 1]} : vector<8x2xf32> to vector<1x2xf32>
    %c0_5 = arith.constant 0 : index
    %c0_6 = arith.constant 0 : index
    %10 = vector.load %arg4[%c0_5, %c0_6] : memref<1x2xf32, #tpu.memory_space<vmem>>, vector<1x2xf32>
    %cst_7 = arith.constant 0.00999999977 : f32
    %11 = vector.broadcast %cst_7 : f32 to vector<1x2xf32>
    %c0_8 = arith.constant 0 : index
    %c0_9 = arith.constant 0 : index
    %12 = vector.load %arg3[%c0_8, %c0_9] : memref<100x5xf32, #tpu.memory_space<vmem>>, vector<100x5xf32>
    %cst_10 = arith.constant dense<0.000000e+00> : vector<100x2xf32>
    %13 = tpu.matmul %12, %8, %cst_10 {dimension_numbers = #tpu.dot_dimension_numbers<[1], [0], [0], [1], [0, 0, 1, 1], [], []>} : vector<100x5xf32>, vector<5x2xf32>, vector<100x2xf32> -> vector<100x2xf32>
    %14 = arith.subf %7, %10 : vector<1x2xf32>
    %15 = arith.mulf %14, %9 : vector<1x2xf32>
    %cst_11 = arith.constant 0.00999999977 : f32
    %16 = vector.broadcast %cst_11 : f32 to vector<1x2xf32>
    %17 = arith.mulf %15, %16 : vector<1x2xf32>
    %18 = vector.broadcast %17 : vector<1x2xf32> to vector<100x2xf32>
    %19 = arith.mulf %13, %18 : vector<100x2xf32>
    %cst_12 = arith.constant 1.562500e+00 : f32
    %20 = vector.broadcast %cst_12 : f32 to vector<1x2xf32>
    %21 = arith.mulf %20, %7 : vector<1x2xf32>
    %22 = vector.broadcast %21 : vector<1x2xf32> to vector<100x2xf32>
    %23 = arith.addf %19, %22 : vector<100x2xf32>
    %c0_13 = arith.constant 0 : index
    %c0_14 = arith.constant 0 : index
    %24 = vector.load %arg6[%c0_13, %c0_14] : memref<100x2xf32, #tpu.memory_space<vmem>>, vector<100x2xf32>
    tpu.vector_store %arg6[%c0_13, %c0_14], %23 {strides = array<i32>} : memref<100x2xf32, #tpu.memory_space<vmem>>, vector<100x2xf32>,
    %c0_15 = arith.constant 0 : index
    %c0_16 = arith.constant 0 : index
    %25 = vector.load %arg6[%c0_15, %c0_16] : memref<100x2xf32, #tpu.memory_space<vmem>>, vector<1x2xf32>
    %cst_17 = arith.constant 0.00999999977 : f32
    %26 = vector.broadcast %cst_17 : f32 to vector<1x2xf32>
    %27 = arith.mulf %26, %11 : vector<1x2xf32>
    %28 = arith.addf %10, %27 : vector<1x2xf32>
    %cst_18 = arith.constant 7.500000e-01 : f32
    %29 = vector.broadcast %cst_18 : f32 to vector<1x2xf32>
    %30 = arith.mulf %29, %11 : vector<1x2xf32>
    %cst_19 = arith.constant 1.562500e+00 : f32
    %31 = vector.broadcast %cst_19 : f32 to vector<1x2xf32>
    %32 = arith.mulf %31, %10 : vector<1x2xf32>
    %33 = arith.subf %30, %32 : vector<1x2xf32>
    %34 = arith.addf %33, %25 : vector<1x2xf32>
    %c1 = arith.constant 1 : index
    %c0_20 = arith.constant 0 : index
    %35 = vector.load %arg6[%c1, %c0_20] : memref<100x2xf32, #tpu.memory_space<vmem>>, vector<1x2xf32>
    %cst_21 = arith.constant 0.00999999977 : f32
    %36 = vector.broadcast %cst_21 : f32 to vector<1x2xf32>
    %37 = arith.mulf %36, %34 : vector<1x2xf32>
    %38 = arith.addf %28, %37 : vector<1x2xf32>
    %cst_22 = arith.constant 7.500000e-01 : f32
    %39 = vector.broadcast %cst_22 : f32 to vector<1x2xf32>
    %40 = arith.mulf %39, %34 : vector<1x2xf32>
    %cst_23 = arith.constant 1.562500e+00 : f32
    %41 = vector.broadcast %cst_23 : f32 to vector<1x2xf32>
    %42 = arith.mulf %41, %28 : vector<1x2xf32>
    %43 = arith.subf %40, %42 : vector<1x2xf32>
    %44 = arith.addf %43, %35 : vector<1x2xf32>
    %c2 = arith.constant 2 : index
    %c0_24 = arith.constant 0 : index
    %45 = vector.load %arg6[%c2, %c0_24] : memref<100x2xf32, #tpu.memory_space<vmem>>, vector<1x2xf32>
    %cst_25 = arith.constant 0.00999999977 : f32
    %46 = vector.broadcast %cst_25 : f32 to vector<1x2xf32>
    %47 = arith.mulf %46, %44 : vector<1x2xf32>
    %48 = arith.addf %38, %47 : vector<1x2xf32>
    %cst_26 = arith.constant 7.500000e-01 : f32
    %49 = vector.broadcast %cst_26 : f32 to vector<1x2xf32>
    %50 = arith.mulf %49, %44 : vector<1x2xf32>
    %cst_27 = arith.constant 1.562500e+00 : f32
    %51 = vector.broadcast %cst_27 : f32 to vector<1x2xf32>
    %52 = arith.mulf %51, %38 : vector<1x2xf32>
    %53 = arith.subf %50, %52 : vector<1x2xf32>
    %54 = arith.addf %53, %45 : vector<1x2xf32>
    %c3 = arith.constant 3 : index
    %c0_28 = arith.constant 0 : index
    %55 = vector.load %arg6[%c3, %c0_28] : memref<100x2xf32, #tpu.memory_space<vmem>>, vector<1x2xf32>
    %cst_29 = arith.constant 0.00999999977 : f32
    %56 = vector.broadcast %cst_29 : f32 to vector<1x2xf32>
    %57 = arith.mulf %56, %54 : vector<1x2xf32>
    %58 = arith.addf %48, %57 : vector<1x2xf32>
    %cst_30 = arith.constant 7.500000e-01 : f32
    %59 = vector.broadcast %cst_30 : f32 to vector<1x2xf32>
    %60 = arith.mulf %59, %54 : vector<1x2xf32>
    %cst_31 = arith.constant 1.562500e+00 : f32
    %61 = vector.broadcast %cst_31 : f32 to vector<1x2xf32>
    %62 = arith.mulf %61, %48 : vector<1x2xf32>
    %63 = arith.subf %60, %62 : vector<1x2xf32>
    %64 = arith.addf %63, %55 : vector<1x2xf32>
    %c4 = arith.constant 4 : index
    %c0_32 = arith.constant 0 : index
    %65 = vector.load %arg6[%c4, %c0_32] : memref<100x2xf32, #tpu.memory_space<vmem>>, vector<1x2xf32>
    %cst_33 = arith.constant 0.00999999977 : f32
    %66 = vector.broadcast %cst_33 : f32 to vector<1x2xf32>
    %67 = arith.mulf %66, %64 : vector<1x2xf32>
    %68 = arith.addf %58, %67 : vector<1x2xf32>
    %cst_34 = arith.constant 7.500000e-01 : f32
    %69 = vector.broadcast %cst_34 : f32 to vector<1x2xf32>
    %70 = arith.mulf %69, %64 : vector<1x2xf32>
    %cst_35 = arith.constant 1.562500e+00 : f32
    %71 = vector.broadcast %cst_35 : f32 to vector<1x2xf32>
    %72 = arith.mulf %71, %58 : vector<1x2xf32>
    %73 = arith.subf %70, %72 : vector<1x2xf32>
    %74 = arith.addf %73, %65 : vector<1x2xf32>
    %c5 = arith.constant 5 : index
    %c0_36 = arith.constant 0 : index
    %75 = vector.load %arg6[%c5, %c0_36] : memref<100x2xf32, #tpu.memory_space<vmem>>, vector<1x2xf32>
    %cst_37 = arith.constant 0.00999999977 : f32
    %76 = vector.broadcast %cst_37 : f32 to vector<1x2xf32>
    %77 = arith.mulf %76, %74 : vector<1x2xf32>
    %78 = arith.addf %68, %77 : vector<1x2xf32>
    %cst_38 = arith.constant 7.500000e-01 : f32
    %79 = vector.broadcast %cst_38 : f32 to vector<1x2xf32>
    %80 = arith.mulf %79, %74 : vector<1x2xf32>
    %cst_39 = arith.constant 1.562500e+00 : f32
    %81 = vector.broadcast %cst_39 : f32 to vector<1x2xf32>
    %82 = arith.mulf %81, %68 : vector<1x2xf32>
    %83 = arith.subf %80, %82 : vector<1x2xf32>
    %84 = arith.addf %83, %75 : vector<1x2xf32>
    %c6 = arith.constant 6 : index
    %c0_40 = arith.constant 0 : index
    %85 = vector.load %arg6[%c6, %c0_40] : memref<100x2xf32, #tpu.memory_space<vmem>>, vector<1x2xf32>
    %cst_41 = arith.constant 0.00999999977 : f32
    %86 = vector.broadcast %cst_41 : f32 to vector<1x2xf32>
    %87 = arith.mulf %86, %84 : vector<1x2xf32>
    %88 = arith.addf %78, %87 : vector<1x2xf32>
    %cst_42 = arith.constant 7.500000e-01 : f32
    %89 = vector.broadcast %cst_42 : f32 to vector<1x2xf32>
    %90 = arith.mulf %89, %84 : vector<1x2xf32>
    %cst_43 = arith.constant 1.562500e+00 : f32
    %91 = vector.broadcast %cst_43 : f32 to vector<1x2xf32>
    %92 = arith.mulf %91, %78 : vector<1x2xf32>
    %93 = arith.subf %90, %92 : vector<1x2xf32>
    %94 = arith.addf %93, %85 : vector<1x2xf32>
    %95 = tpu.concatenate %10, %28, %38, %48, %58, %68, %78, %88 in 0 : vector<1x2xf32>, vector<1x2xf32>, vector<1x2xf32>, vector<1x2xf32>, vector<1x2xf32>, vector<1x2xf32>, vector<1x2xf32>, vector<1x2xf32> -> vector<8x2xf32>
    %c0_44 = arith.constant 0 : index
    %c0_45 = arith.constant 0 : index
    %96 = vector.load %arg5[%c0_44, %c0_45] : memref<101x2xf32, #tpu.memory_space<vmem>>, vector<8x2xf32>
    tpu.vector_store %arg5[%c0_44, %c0_45], %95 {strides = array<i32>} : memref<101x2xf32, #tpu.memory_space<vmem>>, vector<8x2xf32>,
    %c0_i32 = arith.constant 0 : i32
    %c11_i32 = arith.constant 11 : i32
    %97 = arith.addi %c0_i32, %c11_i32 : i32
    %c1_i32 = arith.constant 1 : i32
    %98:2 = scf.for %arg7 = %c0_i32 to %97 step %c1_i32 iter_args(%arg8 = %88, %arg9 = %94) -> (vector<1x2xf32>, vector<1x2xf32>)  : i32 {
      %c8_i32 = arith.constant 8 : i32
      %144 = arith.muli %arg7, %c8_i32 : i32
      %c8_i32_66 = arith.constant 8 : i32
      %145 = arith.addi %c8_i32_66, %144 : i32
      %146 = tpu.assume_multiple %145, 8 : i32
      %c1_i32_67 = arith.constant 1 : i32
      %147 = arith.subi %146, %c1_i32_67 : i32
      %148 = arith.index_cast %147 : i32 to index
      %c0_68 = arith.constant 0 : index
      %149 = vector.load %arg6[%148, %c0_68] : memref<100x2xf32, #tpu.memory_space<vmem>>, vector<8x2xf32>
      %150 = vector.extract_strided_slice %149 {offsets = [0, 0], sizes = [1, 2], strides = [1, 1]} : vector<8x2xf32> to vector<1x2xf32>
      %cst_69 = arith.constant 0.00999999977 : f32
      %151 = vector.broadcast %cst_69 : f32 to vector<1x2xf32>
      %152 = arith.mulf %151, %arg9 : vector<1x2xf32>
      %153 = arith.addf %arg8, %152 : vector<1x2xf32>
      %cst_70 = arith.constant 7.500000e-01 : f32
      %154 = vector.broadcast %cst_70 : f32 to vector<1x2xf32>
      %155 = arith.mulf %154, %arg9 : vector<1x2xf32>
      %cst_71 = arith.constant 1.562500e+00 : f32
      %156 = vector.broadcast %cst_71 : f32 to vector<1x2xf32>
      %157 = arith.mulf %156, %arg8 : vector<1x2xf32>
      %158 = arith.subf %155, %157 : vector<1x2xf32>
      %159 = arith.addf %158, %150 : vector<1x2xf32>
      %160 = vector.extract_strided_slice %149 {offsets = [1, 0], sizes = [1, 2], strides = [1, 1]} : vector<8x2xf32> to vector<1x2xf32>
      %cst_72 = arith.constant 0.00999999977 : f32
      %161 = vector.broadcast %cst_72 : f32 to vector<1x2xf32>
      %162 = arith.mulf %161, %159 : vector<1x2xf32>
      %163 = arith.addf %153, %162 : vector<1x2xf32>
      %cst_73 = arith.constant 7.500000e-01 : f32
      %164 = vector.broadcast %cst_73 : f32 to vector<1x2xf32>
      %165 = arith.mulf %164, %159 : vector<1x2xf32>
      %cst_74 = arith.constant 1.562500e+00 : f32
      %166 = vector.broadcast %cst_74 : f32 to vector<1x2xf32>
      %167 = arith.mulf %166, %153 : vector<1x2xf32>
      %168 = arith.subf %165, %167 : vector<1x2xf32>
      %169 = arith.addf %168, %160 : vector<1x2xf32>
      %170 = vector.extract_strided_slice %149 {offsets = [2, 0], sizes = [1, 2], strides = [1, 1]} : vector<8x2xf32> to vector<1x2xf32>
      %cst_75 = arith.constant 0.00999999977 : f32
      %171 = vector.broadcast %cst_75 : f32 to vector<1x2xf32>
      %172 = arith.mulf %171, %169 : vector<1x2xf32>
      %173 = arith.addf %163, %172 : vector<1x2xf32>
      %cst_76 = arith.constant 7.500000e-01 : f32
      %174 = vector.broadcast %cst_76 : f32 to vector<1x2xf32>
      %175 = arith.mulf %174, %169 : vector<1x2xf32>
      %cst_77 = arith.constant 1.562500e+00 : f32
      %176 = vector.broadcast %cst_77 : f32 to vector<1x2xf32>
      %177 = arith.mulf %176, %163 : vector<1x2xf32>
      %178 = arith.subf %175, %177 : vector<1x2xf32>
      %179 = arith.addf %178, %170 : vector<1x2xf32>
      %180 = vector.extract_strided_slice %149 {offsets = [3, 0], sizes = [1, 2], strides = [1, 1]} : vector<8x2xf32> to vector<1x2xf32>
      %cst_78 = arith.constant 0.00999999977 : f32
      %181 = vector.broadcast %cst_78 : f32 to vector<1x2xf32>
      %182 = arith.mulf %181, %179 : vector<1x2xf32>
      %183 = arith.addf %173, %182 : vector<1x2xf32>
      %cst_79 = arith.constant 7.500000e-01 : f32
      %184 = vector.broadcast %cst_79 : f32 to vector<1x2xf32>
      %185 = arith.mulf %184, %179 : vector<1x2xf32>
      %cst_80 = arith.constant 1.562500e+00 : f32
      %186 = vector.broadcast %cst_80 : f32 to vector<1x2xf32>
      %187 = arith.mulf %186, %173 : vector<1x2xf32>
      %188 = arith.subf %185, %187 : vector<1x2xf32>
      %189 = arith.addf %188, %180 : vector<1x2xf32>
      %190 = vector.extract_strided_slice %149 {offsets = [4, 0], sizes = [1, 2], strides = [1, 1]} : vector<8x2xf32> to vector<1x2xf32>
      %cst_81 = arith.constant 0.00999999977 : f32
      %191 = vector.broadcast %cst_81 : f32 to vector<1x2xf32>
      %192 = arith.mulf %191, %189 : vector<1x2xf32>
      %193 = arith.addf %183, %192 : vector<1x2xf32>
      %cst_82 = arith.constant 7.500000e-01 : f32
      %194 = vector.broadcast %cst_82 : f32 to vector<1x2xf32>
      %195 = arith.mulf %194, %189 : vector<1x2xf32>
      %cst_83 = arith.constant 1.562500e+00 : f32
      %196 = vector.broadcast %cst_83 : f32 to vector<1x2xf32>
      %197 = arith.mulf %196, %183 : vector<1x2xf32>
      %198 = arith.subf %195, %197 : vector<1x2xf32>
      %199 = arith.addf %198, %190 : vector<1x2xf32>
      %200 = vector.extract_strided_slice %149 {offsets = [5, 0], sizes = [1, 2], strides = [1, 1]} : vector<8x2xf32> to vector<1x2xf32>
      %cst_84 = arith.constant 0.00999999977 : f32
      %201 = vector.broadcast %cst_84 : f32 to vector<1x2xf32>
      %202 = arith.mulf %201, %199 : vector<1x2xf32>
      %203 = arith.addf %193, %202 : vector<1x2xf32>
      %cst_85 = arith.constant 7.500000e-01 : f32
      %204 = vector.broadcast %cst_85 : f32 to vector<1x2xf32>
      %205 = arith.mulf %204, %199 : vector<1x2xf32>
      %cst_86 = arith.constant 1.562500e+00 : f32
      %206 = vector.broadcast %cst_86 : f32 to vector<1x2xf32>
      %207 = arith.mulf %206, %193 : vector<1x2xf32>
      %208 = arith.subf %205, %207 : vector<1x2xf32>
      %209 = arith.addf %208, %200 : vector<1x2xf32>
      %210 = vector.extract_strided_slice %149 {offsets = [6, 0], sizes = [1, 2], strides = [1, 1]} : vector<8x2xf32> to vector<1x2xf32>
      %cst_87 = arith.constant 0.00999999977 : f32
      %211 = vector.broadcast %cst_87 : f32 to vector<1x2xf32>
      %212 = arith.mulf %211, %209 : vector<1x2xf32>
      %213 = arith.addf %203, %212 : vector<1x2xf32>
      %cst_88 = arith.constant 7.500000e-01 : f32
      %214 = vector.broadcast %cst_88 : f32 to vector<1x2xf32>
      %215 = arith.mulf %214, %209 : vector<1x2xf32>
      %cst_89 = arith.constant 1.562500e+00 : f32
      %216 = vector.broadcast %cst_89 : f32 to vector<1x2xf32>
      %217 = arith.mulf %216, %203 : vector<1x2xf32>
      %218 = arith.subf %215, %217 : vector<1x2xf32>
      %219 = arith.addf %218, %210 : vector<1x2xf32>
      %220 = vector.extract_strided_slice %149 {offsets = [7, 0], sizes = [1, 2], strides = [1, 1]} : vector<8x2xf32> to vector<1x2xf32>
      %cst_90 = arith.constant 0.00999999977 : f32
      %221 = vector.broadcast %cst_90 : f32 to vector<1x2xf32>
      %222 = arith.mulf %221, %219 : vector<1x2xf32>
      %223 = arith.addf %213, %222 : vector<1x2xf32>
      %cst_91 = arith.constant 7.500000e-01 : f32
      %224 = vector.broadcast %cst_91 : f32 to vector<1x2xf32>
      %225 = arith.mulf %224, %219 : vector<1x2xf32>
      %cst_92 = arith.constant 1.562500e+00 : f32
      %226 = vector.broadcast %cst_92 : f32 to vector<1x2xf32>
      %227 = arith.mulf %226, %213 : vector<1x2xf32>
      %228 = arith.subf %225, %227 : vector<1x2xf32>
      %229 = arith.addf %228, %220 : vector<1x2xf32>
      %230 = tpu.concatenate %153, %163, %173, %183, %193, %203, %213, %223 in 0 : vector<1x2xf32>, vector<1x2xf32>, vector<1x2xf32>, vector<1x2xf32>, vector<1x2xf32>, vector<1x2xf32>, vector<1x2xf32>, vector<1x2xf32> -> vector<8x2xf32>
      %231 = arith.index_cast %146 : i32 to index
      %c0_93 = arith.constant 0 : index
      %232 = vector.load %arg5[%231, %c0_93] : memref<101x2xf32, #tpu.memory_space<vmem>>, vector<8x2xf32>
      tpu.vector_store %arg5[%231, %c0_93], %230 {strides = array<i32>} : memref<101x2xf32, #tpu.memory_space<vmem>>, vector<8x2xf32>,
      scf.yield %223, %229 : vector<1x2xf32>, vector<1x2xf32>
    }
    %c11_i32_46 = arith.constant 11 : i32
    %c95 = arith.constant 95 : index
    %c0_47 = arith.constant 0 : index
    %99 = vector.load %arg6[%c95, %c0_47] : memref<100x2xf32, #tpu.memory_space<vmem>>, vector<1x2xf32>
    %cst_48 = arith.constant 0.00999999977 : f32
    %100 = vector.broadcast %cst_48 : f32 to vector<1x2xf32>
    %101 = arith.mulf %100, %98#1 : vector<1x2xf32>
    %102 = arith.addf %98#0, %101 : vector<1x2xf32>
    %cst_49 = arith.constant 7.500000e-01 : f32
    %103 = vector.broadcast %cst_49 : f32 to vector<1x2xf32>
    %104 = arith.mulf %103, %98#1 : vector<1x2xf32>
    %cst_50 = arith.constant 1.562500e+00 : f32
    %105 = vector.broadcast %cst_50 : f32 to vector<1x2xf32>
    %106 = arith.mulf %105, %98#0 : vector<1x2xf32>
    %107 = arith.subf %104, %106 : vector<1x2xf32>
    %108 = arith.addf %107, %99 : vector<1x2xf32>
    %c96 = arith.constant 96 : index
    %c0_51 = arith.constant 0 : index
    %109 = vector.load %arg6[%c96, %c0_51] : memref<100x2xf32, #tpu.memory_space<vmem>>, vector<1x2xf32>
    %cst_52 = arith.constant 0.00999999977 : f32
    %110 = vector.broadcast %cst_52 : f32 to vector<1x2xf32>
    %111 = arith.mulf %110, %108 : vector<1x2xf32>
    %112 = arith.addf %102, %111 : vector<1x2xf32>
    %cst_53 = arith.constant 7.500000e-01 : f32
    %113 = vector.broadcast %cst_53 : f32 to vector<1x2xf32>
    %114 = arith.mulf %113, %108 : vector<1x2xf32>
    %cst_54 = arith.constant 1.562500e+00 : f32
    %115 = vector.broadcast %cst_54 : f32 to vector<1x2xf32>
    %116 = arith.mulf %115, %102 : vector<1x2xf32>
    %117 = arith.subf %114, %116 : vector<1x2xf32>
    %118 = arith.addf %117, %109 : vector<1x2xf32>
    %c97 = arith.constant 97 : index
    %c0_55 = arith.constant 0 : index
    %119 = vector.load %arg6[%c97, %c0_55] : memref<100x2xf32, #tpu.memory_space<vmem>>, vector<1x2xf32>
    %cst_56 = arith.constant 0.00999999977 : f32
    %120 = vector.broadcast %cst_56 : f32 to vector<1x2xf32>
    %121 = arith.mulf %120, %118 : vector<1x2xf32>
    %122 = arith.addf %112, %121 : vector<1x2xf32>
    %cst_57 = arith.constant 7.500000e-01 : f32
    %123 = vector.broadcast %cst_57 : f32 to vector<1x2xf32>
    %124 = arith.mulf %123, %118 : vector<1x2xf32>
    %cst_58 = arith.constant 1.562500e+00 : f32
    %125 = vector.broadcast %cst_58 : f32 to vector<1x2xf32>
    %126 = arith.mulf %125, %112 : vector<1x2xf32>
    %127 = arith.subf %124, %126 : vector<1x2xf32>
    %128 = arith.addf %127, %119 : vector<1x2xf32>
    %c98 = arith.constant 98 : index
    %c0_59 = arith.constant 0 : index
    %129 = vector.load %arg6[%c98, %c0_59] : memref<100x2xf32, #tpu.memory_space<vmem>>, vector<1x2xf32>
    %cst_60 = arith.constant 0.00999999977 : f32
    %130 = vector.broadcast %cst_60 : f32 to vector<1x2xf32>
    %131 = arith.mulf %130, %128 : vector<1x2xf32>
    %132 = arith.addf %122, %131 : vector<1x2xf32>
    %cst_61 = arith.constant 7.500000e-01 : f32
    %133 = vector.broadcast %cst_61 : f32 to vector<1x2xf32>
    %134 = arith.mulf %133, %128 : vector<1x2xf32>
    %cst_62 = arith.constant 1.562500e+00 : f32
    %135 = vector.broadcast %cst_62 : f32 to vector<1x2xf32>
    %136 = arith.mulf %135, %122 : vector<1x2xf32>
    %137 = arith.subf %134, %136 : vector<1x2xf32>
    %138 = arith.addf %137, %129 : vector<1x2xf32>
    %cst_63 = arith.constant 0.00999999977 : f32
    %139 = vector.broadcast %cst_63 : f32 to vector<1x2xf32>
    %140 = arith.mulf %139, %138 : vector<1x2xf32>
    %141 = arith.addf %132, %140 : vector<1x2xf32>
    %142 = tpu.concatenate %102, %112, %122, %132, %141 in 0 : vector<1x2xf32>, vector<1x2xf32>, vector<1x2xf32>, vector<1x2xf32>, vector<1x2xf32> -> vector<5x2xf32>
    %c96_64 = arith.constant 96 : index
    %c0_65 = arith.constant 0 : index
    %143 = vector.load %arg5[%c96_64, %c0_65] : memref<101x2xf32, #tpu.memory_space<vmem>>, vector<5x2xf32>
    tpu.vector_store %arg5[%c96_64, %c0_65], %142 {strides = array<i32>} : memref<101x2xf32, #tpu.memory_space<vmem>>, vector<5x2xf32>,
    return
  }
}

</mosaic_0001>

<llo_original>
// kernel: neuroscribe_forward.1
$region0: #{neuroscribe_forward.1}
  #allocation0 [shape = 'u32[]', space=smem, size = 0x4, offset = 0x4, fixed_abs, tag = 'smem constant byte address 0x4 - core index']
  #allocation1 [shape = 'u32[144,128]{1,0:T(1,128)}', space=vmem, size = 0x12000, scoped, tag = 'internal scratch']
  #allocation2 [shape = 'f32[100,2]{1,0:T(8,128)}', space=vmem, size = 0xd000, scoped, tag = 'scratch operand']
  %s0 = inlined_call_operand.vmem [shape: f32[2,1920], index: 0, kind: input, shape index: {}]
  %s1 = inlined_call_operand.vmem [shape: bf16[8,1920], index: 1, kind: input, shape index: {}]
  %s2 = inlined_call_operand.vmem [shape: f32[8,1], index: 2, kind: input, shape index: {}]
  %s3 = inlined_call_operand.vmem [shape: f32[100,5], index: 3, kind: input, shape index: {}]
  %s4 = inlined_call_operand.vmem [shape: f32[1,2], index: 4, kind: input, shape index: {}]
  %s5 = inlined_call_operand.vmem [shape: f32[101,2], index: 5, kind: output, shape index: {}]
  %s6 = sld [smem:[#allocation0]]
  $region37: #{neuroscribe_forward.1} parent=0
    _
  %s8 = ssub.s32 1, %s6
  %s9 = scalar_select 0, %s8, %s6
  // Predicated region
  $region2: #{neuroscribe_forward.1} parent=0 // pred_check
    _
  $region3: #{neuroscribe_forward.1} parent=0 // pred_check_branch
    %11 = sbr.rel (0) target = $region5
  $region4: #{neuroscribe_forward.1} parent=0 // pred_region
    _
  $region5: #{neuroscribe_forward.1} parent=0 // pred_fallthru
    _
  // Predicated region
  $region6: #{neuroscribe_forward.1} parent=0 // pred_check
    _
  $region7: #{neuroscribe_forward.1} parent=0 // pred_check_branch
    %13 = sbr.rel (0) target = $region9
  $region8: #{neuroscribe_forward.1} parent=0 // pred_region
    _
  $region9: #{neuroscribe_forward.1} parent=0 // pred_fallthru
    _
  // Predicated region
  $region10: #{neuroscribe_forward.1} parent=0 // pred_check
    _
  $region11: #{neuroscribe_forward.1} parent=0 // pred_check_branch
    %15 = sbr.rel (0) target = $region13
  $region12: #{neuroscribe_forward.1} parent=0 // pred_region
    _
  $region13: #{neuroscribe_forward.1} parent=0 // pred_fallthru
    _
  // Predicated region
  $region14: #{neuroscribe_forward.1} parent=0 // pred_check
    _
  $region15: #{neuroscribe_forward.1} parent=0 // pred_check_branch
    %17 = sbr.rel (0) target = $region17
  $region16: #{neuroscribe_forward.1} parent=0 // pred_region
    _
  $region17: #{neuroscribe_forward.1} parent=0 // pred_fallthru
    _
  // Predicated region
  $region18: #{neuroscribe_forward.1} parent=0 // pred_check
    _
  $region19: #{neuroscribe_forward.1} parent=0 // pred_check_branch
    %19 = sbr.rel (0) target = $region21
  $region20: #{neuroscribe_forward.1} parent=0 // pred_region
    _
  $region21: #{neuroscribe_forward.1} parent=0 // pred_fallthru
    _
  %v21 = vld [vmem:[%s0] sm:$0xff]
  %v22 = vld [vmem:[%s0 + $0x8] sm:$0xff]
  %v23 = vld [vmem:[%s0 + $0x10] sm:$0xff]
  %v24 = vld [vmem:[%s0 + $0x18] sm:$0x3f]
  %v29 = vcombine.high %v21, %v21
  %v31 = vunpack.c.l.s4 1983009808
  %v32 = vunpack.c.0.s8 %v31
  %v33 = vlaneseq
  %v34 = vshrl.u32 %v33, 7
  %v35 = vsub.s32 %v32, %v34
  %v36 = vrot.slane %v21, %v35
  %v38 = vunpack.c.l.s4 1983009808
  %v39 = vunpack.c.0.s8 %v38
  %v40 = vlaneseq
  %v41 = vshrl.u32 %v40, 7
  %v42 = vsub.s32 %v39, %v41
  %v43 = vrot.slane %v29, %v42
  %v44 = vcombine.high %v36, %v36
  %v45 = vcombine.high %v43, %v43
  %v46 = vcombine.high %v22, %v22
  %v48 = vunpack.c.l.s4 1983009808
  %v49 = vunpack.c.0.s8 %v48
  %v50 = vlaneseq
  %v51 = vshrl.u32 %v50, 7
  %v52 = vsub.s32 %v49, %v51
  %v53 = vrot.slane %v22, %v52
  %v55 = vunpack.c.l.s4 1983009808
  %v56 = vunpack.c.0.s8 %v55
  %v57 = vlaneseq
  %v58 = vshrl.u32 %v57, 7
  %v59 = vsub.s32 %v56, %v58
  %v60 = vrot.slane %v46, %v59
  %v61 = vcombine.high %v53, %v53
  %v62 = vcombine.high %v60, %v60
  %v63 = vcombine.high %v23, %v23
  %v65 = vunpack.c.l.s4 1983009808
  %v66 = vunpack.c.0.s8 %v65
  %v67 = vlaneseq
  %v68 = vshrl.u32 %v67, 7
  %v69 = vsub.s32 %v66, %v68
  %v70 = vrot.slane %v23, %v69
  %v72 = vunpack.c.l.s4 1983009808
  %v73 = vunpack.c.0.s8 %v72
  %v74 = vlaneseq
  %v75 = vshrl.u32 %v74, 7
  %v76 = vsub.s32 %v73, %v75
  %v77 = vrot.slane %v63, %v76
  %v78 = vcombine.high %v70, %v70
  %v79 = vcombine.high %v77, %v77
  %v80 = vcombine.high %v24, %v24
  %v82 = vunpack.c.l.s4 1983009808
  %v83 = vunpack.c.0.s8 %v82
  %v84 = vlaneseq
  %v85 = vshrl.u32 %v84, 7
  %v86 = vsub.s32 %v83, %v85
  %v87 = vrot.slane %v24, %v86
  %v89 = vunpack.c.l.s4 1983009808
  %v90 = vunpack.c.0.s8 %v89
  %v91 = vlaneseq
  %v92 = vshrl.u32 %v91, 7
  %v93 = vsub.s32 %v90, %v92
  %v94 = vrot.slane %v80, %v93
  %v95 = vcombine.high %v87, %v87
  %v111 = vpack.c.bf16 %v36, %v36
  %v112 = vpack.c.bf16 %v44, %v44
  %v113 = vpack.c.bf16 %v43, %v43
  %v114 = vpack.c.bf16 %v45, %v45
  %v115 = vpack.c.bf16 %v53, %v53
  %v116 = vpack.c.bf16 %v61, %v61
  %v117 = vpack.c.bf16 %v60, %v60
  %v118 = vpack.c.bf16 %v62, %v62
  %v119 = vpack.c.bf16 %v70, %v70
  %v120 = vpack.c.bf16 %v78, %v78
  %v121 = vpack.c.bf16 %v77, %v77
  %v122 = vpack.c.bf16 %v79, %v79
  %v123 = vpack.c.bf16 %v87, %v87
  %v124 = vpack.c.bf16 %v95, %v95
  %v125 = vpack.c.bf16 %v94, %v94
  %v126 = vld [vmem:[%s1] sm:$0xff]
  %v127 = vld [vmem:[%s1 + $0x8] sm:$0xff]
  %v128 = vld [vmem:[%s1 + $0x10] sm:$0xff]
  %v129 = vld [vmem:[%s1 + $0x18] sm:$0xff]
  %v130 = vld [vmem:[%s1 + $0x20] sm:$0xff]
  %v131 = vld [vmem:[%s1 + $0x28] sm:$0xff]
  %v132 = vld [vmem:[%s1 + $0x30] sm:$0xff]
  %v133 = vld [vmem:[%s1 + $0x38] sm:$0xf]
  %v134 = vld [vmem:[%s2] sm:$0xff]
  %136 = vset.pattern.permute.xlu0 0
  %137 = vperm.xlu0 %136, %v134
  %v138 = vpop.permute.xlu0 %137
  %v148 = vunpack.c.l.b16 %v126
  %v149 = vunpack.c.h.b16 %v126
  %v150 = vunpack.c.l.b16 %v127
  %v151 = vunpack.c.h.b16 %v127
  %v152 = vunpack.c.l.b16 %v128
  %v153 = vunpack.c.h.b16 %v128
  %v154 = vunpack.c.l.b16 %v129
  %v155 = vunpack.c.h.b16 %v129
  %v156 = vunpack.c.l.b16 %v130
  %v157 = vunpack.c.h.b16 %v130
  %v158 = vunpack.c.l.b16 %v131
  %v159 = vunpack.c.h.b16 %v131
  %v160 = vunpack.c.l.b16 %v132
  %v161 = vunpack.c.h.b16 %v132
  %v162 = vunpack.c.l.b16 %v133
  %v163 = vpack.c.b16 %v148, %v148
  %v164 = vpack.c.b16 %v149, %v149
  %v165 = vpack.c.b16 %v150, %v150
  %v166 = vpack.c.b16 %v151, %v151
  %v167 = vpack.c.b16 %v152, %v152
  %v168 = vpack.c.b16 %v153, %v153
  %v169 = vpack.c.b16 %v154, %v154
  %v170 = vpack.c.b16 %v155, %v155
  %v171 = vpack.c.b16 %v156, %v156
  %v172 = vpack.c.b16 %v157, %v157
  %v173 = vpack.c.b16 %v158, %v158
  %v174 = vpack.c.b16 %v159, %v159
  %v175 = vpack.c.b16 %v160, %v160
  %v176 = vpack.c.b16 %v161, %v161
  %v177 = vpack.c.b16 %v162, %v162
  %193 = vmatprep.subr.bf16.mxu0 %v112
  %194 = vmatpush1.bf16.xpose.msra.mxu0 %v111
  %195 = vmatprep.subr.bf16.mxu0 0
  %196 = vmatpush1.bf16.xpose.msra.mxu0 0
  %197 = vmatprep.subr.bf16.mxu0 0
  %198 = vmatpush1.bf16.xpose.msra.mxu0 0
  %199 = vmatprep.subr.bf16.mxu0 0
  %200 = vmatpush1.bf16.xpose.msra.mxu0 0
  %201 = vmatprep.subr.bf16.mxu0 0
  %202 = vmatpush1.bf16.xpose.msra.mxu0 0
  %203 = vmatprep.subr.bf16.mxu0 0
  %204 = vmatpush1.bf16.xpose.msra.mxu0 0
  %205 = vmatprep.subr.bf16.mxu0 0
  %206 = vmatpush1.bf16.xpose.msra.mxu0 0
  %207 = vmatprep.subr.bf16.mxu0 0
  %208 = vmatpush1.bf16.xpose.msra.mxu0 0
  %209 = vmatprep.subr.bf16.mxu0 0
  %210 = vmatpush1.bf16.xpose.msra.mxu0 0
  %211 = vmatprep.subr.bf16.mxu0 0
  %212 = vmatpush1.bf16.xpose.msra.mxu0 0
  %213 = vmatprep.subr.bf16.mxu0 0
  %214 = vmatpush1.bf16.xpose.msra.mxu0 0
  %215 = vmatprep.subr.bf16.mxu0 0
  %216 = vmatpush1.bf16.xpose.msra.mxu0 0
  %217 = vmatprep.subr.bf16.mxu0 0
  %218 = vmatpush1.bf16.xpose.msra.mxu0 0
  %219 = vmatprep.subr.bf16.mxu0 0
  %220 = vmatpush1.bf16.xpose.msra.mxu0 0
  %221 = vmatprep.subr.bf16.mxu0 0
  %222 = vmatpush1.bf16.xpose.msra.mxu0 0
  %223 = vmatprep.subr.bf16.mxu0 0
  %224 = vmatpush1.bf16.xpose.msra.mxu0 0
  %225 = vmatprep.mubr.bf16.mxu0 %v164
  %226 = vmatmul.mubr.bf16.gmra.mrb[0].mxu0 %v163
  %v227 = vpop.f32.mrb[0].mxu0
  %v228 = vadd.f32 %v138, %v227
  %v229 = vpop.f32.mrb[0].mxu0
  %v230 = vpop.f32.mrb[0].mxu0
  %v231 = vpop.f32.mrb[0].mxu0
  %232 = vdwg.mxu0
  %233 = vmatprep.subr.bf16.mxu0 %v114
  %234 = vmatpush1.bf16.xpose.msra.mxu0 %v113
  %235 = vmatprep.subr.bf16.mxu0 0
  %236 = vmatpush1.bf16.xpose.msra.mxu0 0
  %237 = vmatprep.subr.bf16.mxu0 0
  %238 = vmatpush1.bf16.xpose.msra.mxu0 0
  %239 = vmatprep.subr.bf16.mxu0 0
  %240 = vmatpush1.bf16.xpose.msra.mxu0 0
  %241 = vmatprep.subr.bf16.mxu0 0
  %242 = vmatpush1.bf16.xpose.msra.mxu0 0
  %243 = vmatprep.subr.bf16.mxu0 0
  %244 = vmatpush1.bf16.xpose.msra.mxu0 0
  %245 = vmatprep.subr.bf16.mxu0 0
  %246 = vmatpush1.bf16.xpose.msra.mxu0 0
  %247 = vmatprep.subr.bf16.mxu0 0
  %248 = vmatpush1.bf16.xpose.msra.mxu0 0
  %249 = vmatprep.subr.bf16.mxu0 0
  %250 = vmatpush1.bf16.xpose.msra.mxu0 0
  %251 = vmatprep.subr.bf16.mxu0 0
  %252 = vmatpush1.bf16.xpose.msra.mxu0 0
  %253 = vmatprep.subr.bf16.mxu0 0
  %254 = vmatpush1.bf16.xpose.msra.mxu0 0
  %255 = vmatprep.subr.bf16.mxu0 0
  %256 = vmatpush1.bf16.xpose.msra.mxu0 0
  %257 = vmatprep.subr.bf16.mxu0 0
  %258 = vmatpush1.bf16.xpose.msra.mxu0 0
  %259 = vmatprep.subr.bf16.mxu0 0
  %260 = vmatpush1.bf16.xpose.msra.mxu0 0
  %261 = vmatprep.subr.bf16.mxu0 0
  %262 = vmatpush1.bf16.xpose.msra.mxu0 0
  %263 = vmatprep.subr.bf16.mxu0 0
  %264 = vmatpush1.bf16.xpose.msra.mxu0 0
  %265 = vmatprep.mubr.bf16.mxu0 %v166
  %266 = vmatmul.mubr.bf16.gmra.mrb[0].mxu0 %v165
  %v267 = vpop.f32.mrb[0].mxu0
  %v268 = vadd.f32 %v228, %v267
  %v269 = vpop.f32.mrb[0].mxu0
  %v270 = vpop.f32.mrb[0].mxu0
  %v271 = vpop.f32.mrb[0].mxu0
  %272 = vdwg.mxu0
  %273 = vmatprep.subr.bf16.mxu0 %v116
  %274 = vmatpush1.bf16.xpose.msra.mxu0 %v115
  %275 = vmatprep.subr.bf16.mxu0 0
  %276 = vmatpush1.bf16.xpose.msra.mxu0 0
  %277 = vmatprep.subr.bf16.mxu0 0
  %278 = vmatpush1.bf16.xpose.msra.mxu0 0
  %279 = vmatprep.subr.bf16.mxu0 0
  %280 = vmatpush1.bf16.xpose.msra.mxu0 0
  %281 = vmatprep.subr.bf16.mxu0 0
  %282 = vmatpush1.bf16.xpose.msra.mxu0 0
  %283 = vmatprep.subr.bf16.mxu0 0
  %284 = vmatpush1.bf16.xpose.msra.mxu0 0
  %285 = vmatprep.subr.bf16.mxu0 0
  %286 = vmatpush1.bf16.xpose.msra.mxu0 0
  %287 = vmatprep.subr.bf16.mxu0 0
  %288 = vmatpush1.bf16.xpose.msra.mxu0 0
  %289 = vmatprep.subr.bf16.mxu0 0
  %290 = vmatpush1.bf16.xpose.msra.mxu0 0
  %291 = vmatprep.subr.bf16.mxu0 0
  %292 = vmatpush1.bf16.xpose.msra.mxu0 0
  %293 = vmatprep.subr.bf16.mxu0 0
  %294 = vmatpush1.bf16.xpose.msra.mxu0 0
  %295 = vmatprep.subr.bf16.mxu0 0
  %296 = vmatpush1.bf16.xpose.msra.mxu0 0
  %297 = vmatprep.subr.bf16.mxu0 0
  %298 = vmatpush1.bf16.xpose.msra.mxu0 0
  %299 = vmatprep.subr.bf16.mxu0 0
  %300 = vmatpush1.bf16.xpose.msra.mxu0 0
  %301 = vmatprep.subr.bf16.mxu0 0
  %302 = vmatpush1.bf16.xpose.msra.mxu0 0
  %303 = vmatprep.subr.bf16.mxu0 0
  %304 = vmatpush1.bf16.xpose.msra.mxu0 0
  %305 = vmatprep.mubr.bf16.mxu0 %v168
  %306 = vmatmul.mubr.bf16.gmra.mrb[0].mxu0 %v167
  %v307 = vpop.f32.mrb[0].mxu0
  %v308 = vadd.f32 %v268, %v307
  %v309 = vpop.f32.mrb[0].mxu0
  %v310 = vpop.f32.mrb[0].mxu0
  %v311 = vpop.f32.mrb[0].mxu0
  %312 = vdwg.mxu0
  %313 = vmatprep.subr.bf16.mxu0 %v118
  %314 = vmatpush1.bf16.xpose.msra.mxu0 %v117
  %315 = vmatprep.subr.bf16.mxu0 0
  %316 = vmatpush1.bf16.xpose.msra.mxu0 0
  %317 = vmatprep.subr.bf16.mxu0 0
  %318 = vmatpush1.bf16.xpose.msra.mxu0 0
  %319 = vmatprep.subr.bf16.mxu0 0
  %320 = vmatpush1.bf16.xpose.msra.mxu0 0
  %321 = vmatprep.subr.bf16.mxu0 0
  %322 = vmatpush1.bf16.xpose.msra.mxu0 0
  %323 = vmatprep.subr.bf16.mxu0 0
  %324 = vmatpush1.bf16.xpose.msra.mxu0 0
  %325 = vmatprep.subr.bf16.mxu0 0
  %326 = vmatpush1.bf16.xpose.msra.mxu0 0
  %327 = vmatprep.subr.bf16.mxu0 0
  %328 = vmatpush1.bf16.xpose.msra.mxu0 0
  %329 = vmatprep.subr.bf16.mxu0 0
  %330 = vmatpush1.bf16.xpose.msra.mxu0 0
  %331 = vmatprep.subr.bf16.mxu0 0
  %332 = vmatpush1.bf16.xpose.msra.mxu0 0
  %333 = vmatprep.subr.bf16.mxu0 0
  %334 = vmatpush1.bf16.xpose.msra.mxu0 0
  %335 = vmatprep.subr.bf16.mxu0 0
  %336 = vmatpush1.bf16.xpose.msra.mxu0 0
  %337 = vmatprep.subr.bf16.mxu0 0
  %338 = vmatpush1.bf16.xpose.msra.mxu0 0
  %339 = vmatprep.subr.bf16.mxu0 0
  %340 = vmatpush1.bf16.xpose.msra.mxu0 0
  %341 = vmatprep.subr.bf16.mxu0 0
  %342 = vmatpush1.bf16.xpose.msra.mxu0 0
  %343 = vmatprep.subr.bf16.mxu0 0
  %344 = vmatpush1.bf16.xpose.msra.mxu0 0
  %345 = vmatprep.mubr.bf16.mxu0 %v170
  %346 = vmatmul.mubr.bf16.gmra.mrb[0].mxu0 %v169
  %v347 = vpop.f32.mrb[0].mxu0
  %v348 = vadd.f32 %v308, %v347
  %v349 = vpop.f32.mrb[0].mxu0
  %v350 = vpop.f32.mrb[0].mxu0
  %v351 = vpop.f32.mrb[0].mxu0
  %352 = vdwg.mxu0
  %353 = vmatprep.subr.bf16.mxu0 %v120
  %354 = vmatpush1.bf16.xpose.msra.mxu0 %v119
  %355 = vmatprep.subr.bf16.mxu0 0
  %356 = vmatpush1.bf16.xpose.msra.mxu0 0
  %357 = vmatprep.subr.bf16.mxu0 0
  %358 = vmatpush1.bf16.xpose.msra.mxu0 0
  %359 = vmatprep.subr.bf16.mxu0 0
  %360 = vmatpush1.bf16.xpose.msra.mxu0 0
  %361 = vmatprep.subr.bf16.mxu0 0
  %362 = vmatpush1.bf16.xpose.msra.mxu0 0
  %363 = vmatprep.subr.bf16.mxu0 0
  %364 = vmatpush1.bf16.xpose.msra.mxu0 0
  %365 = vmatprep.subr.bf16.mxu0 0
  %366 = vmatpush1.bf16.xpose.msra.mxu0 0
  %367 = vmatprep.subr.bf16.mxu0 0
  %368 = vmatpush1.bf16.xpose.msra.mxu0 0
  %369 = vmatprep.subr.bf16.mxu0 0
  %370 = vmatpush1.bf16.xpose.msra.mxu0 0
  %371 = vmatprep.subr.bf16.mxu0 0
  %372 = vmatpush1.bf16.xpose.msra.mxu0 0
  %373 = vmatprep.subr.bf16.mxu0 0
  %374 = vmatpush1.bf16.xpose.msra.mxu0 0
  %375 = vmatprep.subr.bf16.mxu0 0
  %376 = vmatpush1.bf16.xpose.msra.mxu0 0
  %377 = vmatprep.subr.bf16.mxu0 0
  %378 = vmatpush1.bf16.xpose.msra.mxu0 0
  %379 = vmatprep.subr.bf16.mxu0 0
  %380 = vmatpush1.bf16.xpose.msra.mxu0 0
  %381 = vmatprep.subr.bf16.mxu0 0
  %382 = vmatpush1.bf16.xpose.msra.mxu0 0
  %383 = vmatprep.subr.bf16.mxu0 0
  %384 = vmatpush1.bf16.xpose.msra.mxu0 0
  %385 = vmatprep.mubr.bf16.mxu0 %v172
  %386 = vmatmul.mubr.bf16.gmra.mrb[0].mxu0 %v171
  %v387 = vpop.f32.mrb[0].mxu0
  %v388 = vadd.f32 %v348, %v387
  %v389 = vpop.f32.mrb[0].mxu0
  %v390 = vpop.f32.mrb[0].mxu0
  %v391 = vpop.f32.mrb[0].mxu0
  %392 = vdwg.mxu0
  %393 = vmatprep.subr.bf16.mxu0 %v122
  %394 = vmatpush1.bf16.xpose.msra.mxu0 %v121
  %395 = vmatprep.subr.bf16.mxu0 0
  %396 = vmatpush1.bf16.xpose.msra.mxu0 0
  %397 = vmatprep.subr.bf16.mxu0 0
  %398 = vmatpush1.bf16.xpose.msra.mxu0 0
  %399 = vmatprep.subr.bf16.mxu0 0
  %400 = vmatpush1.bf16.xpose.msra.mxu0 0
  %401 = vmatprep.subr.bf16.mxu0 0
  %402 = vmatpush1.bf16.xpose.msra.mxu0 0
  %403 = vmatprep.subr.bf16.mxu0 0
  %404 = vmatpush1.bf16.xpose.msra.mxu0 0
  %405 = vmatprep.subr.bf16.mxu0 0
  %406 = vmatpush1.bf16.xpose.msra.mxu0 0
  %407 = vmatprep.subr.bf16.mxu0 0
  %408 = vmatpush1.bf16.xpose.msra.mxu0 0
  %409 = vmatprep.subr.bf16.mxu0 0
  %410 = vmatpush1.bf16.xpose.msra.mxu0 0
  %411 = vmatprep.subr.bf16.mxu0 0
  %412 = vmatpush1.bf16.xpose.msra.mxu0 0
  %413 = vmatprep.subr.bf16.mxu0 0
  %414 = vmatpush1.bf16.xpose.msra.mxu0 0
  %415 = vmatprep.subr.bf16.mxu0 0
  %416 = vmatpush1.bf16.xpose.msra.mxu0 0
  %417 = vmatprep.subr.bf16.mxu0 0
  %418 = vmatpush1.bf16.xpose.msra.mxu0 0
  %419 = vmatprep.subr.bf16.mxu0 0
  %420 = vmatpush1.bf16.xpose.msra.mxu0 0
  %421 = vmatprep.subr.bf16.mxu0 0
  %422 = vmatpush1.bf16.xpose.msra.mxu0 0
  %423 = vmatprep.subr.bf16.mxu0 0
  %424 = vmatpush1.bf16.xpose.msra.mxu0 0
  %425 = vmatprep.mubr.bf16.mxu0 %v174
  %426 = vmatmul.mubr.bf16.gmra.mrb[0].mxu0 %v173
  %v427 = vpop.f32.mrb[0].mxu0
  %v428 = vadd.f32 %v388, %v427
  %v429 = vpop.f32.mrb[0].mxu0
  %v430 = vpop.f32.mrb[0].mxu0
  %v431 = vpop.f32.mrb[0].mxu0
  %432 = vdwg.mxu0
  %433 = vmatprep.subr.bf16.mxu0 %v124
  %434 = vmatpush1.bf16.xpose.msra.mxu0 %v123
  %435 = vmatprep.subr.bf16.mxu0 0
  %436 = vmatpush1.bf16.xpose.msra.mxu0 0
  %437 = vmatprep.subr.bf16.mxu0 0
  %438 = vmatpush1.bf16.xpose.msra.mxu0 0
  %439 = vmatprep.subr.bf16.mxu0 0
  %440 = vmatpush1.bf16.xpose.msra.mxu0 0
  %441 = vmatprep.subr.bf16.mxu0 0
  %442 = vmatpush1.bf16.xpose.msra.mxu0 0
  %443 = vmatprep.subr.bf16.mxu0 0
  %444 = vmatpush1.bf16.xpose.msra.mxu0 0
  %445 = vmatprep.subr.bf16.mxu0 0
  %446 = vmatpush1.bf16.xpose.msra.mxu0 0
  %447 = vmatprep.subr.bf16.mxu0 0
  %448 = vmatpush1.bf16.xpose.msra.mxu0 0
  %449 = vmatprep.subr.bf16.mxu0 0
  %450 = vmatpush1.bf16.xpose.msra.mxu0 0
  %451 = vmatprep.subr.bf16.mxu0 0
  %452 = vmatpush1.bf16.xpose.msra.mxu0 0
  %453 = vmatprep.subr.bf16.mxu0 0
  %454 = vmatpush1.bf16.xpose.msra.mxu0 0
  %455 = vmatprep.subr.bf16.mxu0 0
  %456 = vmatpush1.bf16.xpose.msra.mxu0 0
  %457 = vmatprep.subr.bf16.mxu0 0
  %458 = vmatpush1.bf16.xpose.msra.mxu0 0
  %459 = vmatprep.subr.bf16.mxu0 0
  %460 = vmatpush1.bf16.xpose.msra.mxu0 0
  %461 = vmatprep.subr.bf16.mxu0 0
  %462 = vmatpush1.bf16.xpose.msra.mxu0 0
  %463 = vmatprep.subr.bf16.mxu0 0
  %464 = vmatpush1.bf16.xpose.msra.mxu0 0
  %465 = vmatprep.mubr.bf16.mxu0 %v176
  %466 = vmatmul.mubr.bf16.gmra.mrb[0].mxu0 %v175
  %v467 = vpop.f32.mrb[0].mxu0
  %v468 = vadd.f32 %v428, %v467
  %v469 = vpop.f32.mrb[0].mxu0
  %v470 = vpop.f32.mrb[0].mxu0
  %v471 = vpop.f32.mrb[0].mxu0
  %472 = vdwg.mxu0
  %473 = vmatprep.subr.bf16.mxu0 0
  %474 = vmatpush1.bf16.xpose.msra.mxu0 %v125
  %475 = vmatprep.subr.bf16.mxu0 0
  %476 = vmatpush1.bf16.xpose.msra.mxu0 0
  %477 = vmatprep.subr.bf16.mxu0 0
  %478 = vmatpush1.bf16.xpose.msra.mxu0 0
  %479 = vmatprep.subr.bf16.mxu0 0
  %480 = vmatpush1.bf16.xpose.msra.mxu0 0
  %481 = vmatprep.subr.bf16.mxu0 0
  %482 = vmatpush1.bf16.xpose.msra.mxu0 0
  %483 = vmatprep.subr.bf16.mxu0 0
  %484 = vmatpush1.bf16.xpose.msra.mxu0 0
  %485 = vmatprep.subr.bf16.mxu0 0
  %486 = vmatpush1.bf16.xpose.msra.mxu0 0
  %487 = vmatprep.subr.bf16.mxu0 0
  %488 = vmatpush1.bf16.xpose.msra.mxu0 0
  %489 = vmatprep.subr.bf16.mxu0 0
  %490 = vmatpush1.bf16.xpose.msra.mxu0 0
  %491 = vmatprep.subr.bf16.mxu0 0
  %492 = vmatpush1.bf16.xpose.msra.mxu0 0
  %493 = vmatprep.subr.bf16.mxu0 0
  %494 = vmatpush1.bf16.xpose.msra.mxu0 0
  %495 = vmatprep.subr.bf16.mxu0 0
  %496 = vmatpush1.bf16.xpose.msra.mxu0 0
  %497 = vmatprep.subr.bf16.mxu0 0
  %498 = vmatpush1.bf16.xpose.msra.mxu0 0
  %499 = vmatprep.subr.bf16.mxu0 0
  %500 = vmatpush1.bf16.xpose.msra.mxu0 0
  %501 = vmatprep.subr.bf16.mxu0 0
  %502 = vmatpush1.bf16.xpose.msra.mxu0 0
  %503 = vmatprep.subr.bf16.mxu0 0
  %504 = vmatpush1.bf16.xpose.msra.mxu0 0
  %505 = vmatprep.mubr.bf16.mxu0 0
  %506 = vmatmul.mubr.bf16.gmra.mrb[0].mxu0 %v177
  %v507 = vpop.f32.mrb[0].mxu0
  %v508 = vadd.f32 %v468, %v507
  %v509 = vpop.f32.mrb[0].mxu0
  %v510 = vpop.f32.mrb[0].mxu0
  %v511 = vpop.f32.mrb[0].mxu0
  %512 = vdwg.mxu0
  %v513 = vld [vmem:[%s4] sm:$0x1]
  %v514 = vld [vmem:[%s3] sm:$0xff]
  %v515 = vld [vmem:[%s3 + $0x8] sm:$0xff]
  %v516 = vld [vmem:[%s3 + $0x10] sm:$0xff]
  %v517 = vld [vmem:[%s3 + $0x18] sm:$0xff]
  %v518 = vld [vmem:[%s3 + $0x20] sm:$0xff]
  %v519 = vld [vmem:[%s3 + $0x28] sm:$0xff]
  %v520 = vld [vmem:[%s3 + $0x30] sm:$0xff]
  %v521 = vld [vmem:[%s3 + $0x38] sm:$0xff]
  %v522 = vld [vmem:[%s3 + $0x40] sm:$0xff]
  %v523 = vld [vmem:[%s3 + $0x48] sm:$0xff]
  %v524 = vld [vmem:[%s3 + $0x50] sm:$0xff]
  %v525 = vld [vmem:[%s3 + $0x58] sm:$0xff]
  %v526 = vld [vmem:[%s3 + $0x60] sm:$0xf]
  %v528 = vrot.slane %v508, 1
  %vm529 = vcmask 39936
  %v531 = vsel %vm529, %v514, 0
  %v534 = vsel %vm529, %v515, 0
  %v537 = vsel %vm529, %v516, 0
  %v540 = vsel %vm529, %v517, 0
  %v543 = vsel %vm529, %v518, 0
  %v546 = vsel %vm529, %v519, 0
  %v549 = vsel %vm529, %v520, 0
  %v552 = vsel %vm529, %v521, 0
  %v555 = vsel %vm529, %v522, 0
  %v558 = vsel %vm529, %v523, 0
  %v561 = vsel %vm529, %v524, 0
  %v564 = vsel %vm529, %v525, 0
  %v567 = vsel %vm529, %v526, 0
  %vm569 = vcmask 1044480
  %v570 = vsel %vm569, %v528, 0
  %572 = vmatprep.subr.mxu0 0.0
  %573 = vmatpush1.msra.mxu0 %v570
  %574 = vmatprep.subr.mxu0 0.0
  %575 = vmatpush1.msra.mxu0 0.0
  %576 = vmatprep.subr.mxu0 0.0
  %577 = vmatpush1.msra.mxu0 0.0
  %578 = vmatprep.subr.mxu0 0.0
  %579 = vmatpush1.msra.mxu0 0.0
  %580 = vmatprep.subr.mxu0 0.0
  %581 = vmatpush1.msra.mxu0 0.0
  %582 = vmatprep.subr.mxu0 0.0
  %583 = vmatpush1.msra.mxu0 0.0
  %584 = vmatprep.subr.mxu0 0.0
  %585 = vmatpush1.msra.mxu0 0.0
  %586 = vmatprep.subr.mxu0 0.0
  %587 = vmatpush1.msra.mxu0 0.0
  %588 = vmatprep.subr.mxu0 0.0
  %589 = vmatpush1.msra.mxu0 0.0
  %590 = vmatprep.subr.mxu0 0.0
  %591 = vmatpush1.msra.mxu0 0.0
  %592 = vmatprep.subr.mxu0 0.0
  %593 = vmatpush1.msra.mxu0 0.0
  %594 = vmatprep.subr.mxu0 0.0
  %595 = vmatpush1.msra.mxu0 0.0
  %596 = vmatprep.subr.mxu0 0.0
  %597 = vmatpush1.msra.mxu0 0.0
  %598 = vmatprep.subr.mxu0 0.0
  %599 = vmatpush1.msra.mxu0 0.0
  %600 = vmatprep.subr.mxu0 0.0
  %601 = vmatpush1.msra.mxu0 0.0
  %602 = vmatprep.subr.mxu0 0.0
  %603 = vmatpush1.msra.mxu0 0.0
  %604 = vmatprep.subr.mxu0 0.0
  %605 = vmatpush1.msra.mxu0 0.0
  %606 = vmatprep.subr.mxu0 0.0
  %607 = vmatpush1.msra.mxu0 0.0
  %608 = vmatprep.subr.mxu0 0.0
  %609 = vmatpush1.msra.mxu0 0.0
  %610 = vmatprep.subr.mxu0 0.0
  %611 = vmatpush1.msra.mxu0 0.0
  %612 = vmatprep.subr.mxu0 0.0
  %613 = vmatpush1.msra.mxu0 0.0
  %614 = vmatprep.subr.mxu0 0.0
  %615 = vmatpush1.msra.mxu0 0.0
  %616 = vmatprep.subr.mxu0 0.0
  %617 = vmatpush1.msra.mxu0 0.0
  %618 = vmatprep.subr.mxu0 0.0
  %619 = vmatpush1.msra.mxu0 0.0
  %620 = vmatprep.subr.mxu0 0.0
  %621 = vmatpush1.msra.mxu0 0.0
  %622 = vmatprep.subr.mxu0 0.0
  %623 = vmatpush1.msra.mxu0 0.0
  %624 = vmatprep.subr.mxu0 0.0
  %625 = vmatpush1.msra.mxu0 0.0
  %626 = vmatprep.subr.mxu0 0.0
  %627 = vmatpush1.msra.mxu0 0.0
  %628 = vmatprep.subr.mxu0 0.0
  %629 = vmatpush1.msra.mxu0 0.0
  %630 = vmatprep.subr.mxu0 0.0
  %631 = vmatpush1.msra.mxu0 0.0
  %632 = vmatprep.subr.mxu0 0.0
  %633 = vmatpush1.msra.mxu0 0.0
  %634 = vmatprep.subr.mxu0 0.0
  %635 = vmatpush1.msra.mxu0 0.0
  %636 = vmatprep.mubr.f32.mxu0 0.0
  %637 = vmatmul.mubr.f32.gmra.mrb[0].mxu0 %v531
  %v638 = vpop.f32.mrb[0].mxu0
  %v639 = vadd.f32 0.0, %v638
  %v640 = vpop.f32.mrb[0].mxu0
  %641 = vmatprep.mubr.f32.mxu0 0.0
  %642 = vmatmul.mubr.f32.gmra.mrb[0].mxu0 %v534
  %v643 = vpop.f32.mrb[0].mxu0
  %v644 = vadd.f32 0.0, %v643
  %v645 = vpop.f32.mrb[0].mxu0
  %646 = vmatprep.mubr.f32.mxu0 0.0
  %647 = vmatmul.mubr.f32.gmra.mrb[0].mxu0 %v537
  %v648 = vpop.f32.mrb[0].mxu0
  %v649 = vadd.f32 0.0, %v648
  %v650 = vpop.f32.mrb[0].mxu0
  %651 = vmatprep.mubr.f32.mxu0 0.0
  %652 = vmatmul.mubr.f32.gmra.mrb[0].mxu0 %v540
  %v653 = vpop.f32.mrb[0].mxu0
  %v654 = vadd.f32 0.0, %v653
  %v655 = vpop.f32.mrb[0].mxu0
  %656 = vmatprep.mubr.f32.mxu0 0.0
  %657 = vmatmul.mubr.f32.gmra.mrb[0].mxu0 %v543
  %v658 = vpop.f32.mrb[0].mxu0
  %v659 = vadd.f32 0.0, %v658
  %v660 = vpop.f32.mrb[0].mxu0
  %661 = vmatprep.mubr.f32.mxu0 0.0
  %662 = vmatmul.mubr.f32.gmra.mrb[0].mxu0 %v546
  %v663 = vpop.f32.mrb[0].mxu0
  %v664 = vadd.f32 0.0, %v663
  %v665 = vpop.f32.mrb[0].mxu0
  %666 = vmatprep.mubr.f32.mxu0 0.0
  %667 = vmatmul.mubr.f32.gmra.mrb[0].mxu0 %v549
  %v668 = vpop.f32.mrb[0].mxu0
  %v669 = vadd.f32 0.0, %v668
  %v670 = vpop.f32.mrb[0].mxu0
  %671 = vmatprep.mubr.f32.mxu0 0.0
  %672 = vmatmul.mubr.f32.gmra.mrb[0].mxu0 %v552
  %v673 = vpop.f32.mrb[0].mxu0
  %v674 = vadd.f32 0.0, %v673
  %v675 = vpop.f32.mrb[0].mxu0
  %676 = vmatprep.mubr.f32.mxu0 0.0
  %677 = vmatmul.mubr.f32.gmra.mrb[0].mxu0 %v555
  %v678 = vpop.f32.mrb[0].mxu0
  %v679 = vadd.f32 0.0, %v678
  %v680 = vpop.f32.mrb[0].mxu0
  %681 = vmatprep.mubr.f32.mxu0 0.0
  %682 = vmatmul.mubr.f32.gmra.mrb[0].mxu0 %v558
  %v683 = vpop.f32.mrb[0].mxu0
  %v684 = vadd.f32 0.0, %v683
  %v685 = vpop.f32.mrb[0].mxu0
  %686 = vmatprep.mubr.f32.mxu0 0.0
  %687 = vmatmul.mubr.f32.gmra.mrb[0].mxu0 %v561
  %v688 = vpop.f32.mrb[0].mxu0
  %v689 = vadd.f32 0.0, %v688
  %v690 = vpop.f32.mrb[0].mxu0
  %691 = vmatprep.mubr.f32.mxu0 0.0
  %692 = vmatmul.mubr.f32.gmra.mrb[0].mxu0 %v564
  %v693 = vpop.f32.mrb[0].mxu0
  %v694 = vadd.f32 0.0, %v693
  %v695 = vpop.f32.mrb[0].mxu0
  %696 = vmatprep.mubr.f32.mxu0 0.0
  %697 = vmatmul.mubr.f32.gmra.mrb[0].mxu0 %v567
  %v698 = vpop.f32.mrb[0].mxu0
  %v699 = vadd.f32 0.0, %v698
  %v700 = vpop.f32.mrb[0].mxu0
  %701 = vdwg.mxu0
  %v702 = vsub.f32 %v508, %v513
  %v703 = vrot.slane %v508, 6
  %v705 = vmul.f32 %v702, %v703
  %v706 = vmul.f32 %v705, 0.01
  %v707 = vlaneseq
  %v708 = vshrl.u32 %v707, 7
  %v709 = vsub.s32 0, %v708
  %v710 = vrot.slane %v706, %v709
  %v711 = vmul.f32 %v639, %v710
  %v712 = vmul.f32 %v644, %v710
  %v713 = vmul.f32 %v649, %v710
  %v714 = vmul.f32 %v654, %v710
  %v715 = vmul.f32 %v659, %v710
  %v716 = vmul.f32 %v664, %v710
  %v717 = vmul.f32 %v669, %v710
  %v718 = vmul.f32 %v674, %v710
  %v719 = vmul.f32 %v679, %v710
  %v720 = vmul.f32 %v684, %v710
  %v721 = vmul.f32 %v689, %v710
  %v722 = vmul.f32 %v694, %v710
  %v723 = vmul.f32 %v699, %v710
  %v724 = vmul.f32 %v508, 1.5625
  %v725 = vlaneseq
  %v726 = vshrl.u32 %v725, 7
  %v727 = vsub.s32 0, %v726
  %v728 = vrot.slane %v724, %v727
  %v729 = vadd.f32 %v711, %v728
  %v730 = vadd.f32 %v712, %v728
  %v731 = vadd.f32 %v713, %v728
  %v732 = vadd.f32 %v714, %v728
  %v733 = vadd.f32 %v715, %v728
  %v734 = vadd.f32 %v716, %v728
  %v735 = vadd.f32 %v717, %v728
  %v736 = vadd.f32 %v718, %v728
  %v737 = vadd.f32 %v719, %v728
  %v738 = vadd.f32 %v720, %v728
  %v739 = vadd.f32 %v721, %v728
  %v740 = vadd.f32 %v722, %v728
  %v741 = vadd.f32 %v723, %v728
  %vm742 = vcmask 15360
  %743 = vst.msk [vmem:[#allocation2] sm:$0xff] %vm742, %v729
  %744 = vst.msk [vmem:[#allocation2 + $0x8] sm:$0xff] %vm742, %v730
  %745 = vst.msk [vmem:[#allocation2 + $0x10] sm:$0xff] %vm742, %v731
  %746 = vst.msk [vmem:[#allocation2 + $0x18] sm:$0xff] %vm742, %v732
  %747 = vst.msk [vmem:[#allocation2 + $0x20] sm:$0xff] %vm742, %v733
  %748 = vst.msk [vmem:[#allocation2 + $0x28] sm:$0xff] %vm742, %v734
  %749 = vst.msk [vmem:[#allocation2 + $0x30] sm:$0xff] %vm742, %v735
  %750 = vst.msk [vmem:[#allocation2 + $0x38] sm:$0xff] %vm742, %v736
  %751 = vst.msk [vmem:[#allocation2 + $0x40] sm:$0xff] %vm742, %v737
  %752 = vst.msk [vmem:[#allocation2 + $0x48] sm:$0xff] %vm742, %v738
  %753 = vst.msk [vmem:[#allocation2 + $0x50] sm:$0xff] %vm742, %v739
  %754 = vst.msk [vmem:[#allocation2 + $0x58] sm:$0xff] %vm742, %v740
  %vm755 = vcmask 11264
  %756 = vst.msk [vmem:[#allocation2 + $0x60] sm:$0xf] %vm755, %v741
  %v757 = vld [vmem:[#allocation2] sm:$0x1]
  %v758 = vadd.f32 %v513, 0.0001
  %v759 = vmul.f32 %v513, 1.5625
  %v760 = vsub.f32 0.0075, %v759
  %v761 = vadd.f32 %v760, %v757
  %v762 = vld [vmem:[#allocation2 + $0x1] sm:$0x1]
  %v763 = vmul.f32 %v761, 0.01
  %v764 = vadd.f32 %v758, %v763
  %v765 = vmul.f32 %v761, 0.75
  %v766 = vmul.f32 %v758, 1.5625
  %v767 = vsub.f32 %v765, %v766
  %v768 = vadd.f32 %v767, %v762
  %v769 = vld [vmem:[#allocation2 + $0x2] sm:$0x1]
  %v770 = vmul.f32 %v768, 0.01
  %v771 = vadd.f32 %v764, %v770
  %v772 = vmul.f32 %v768, 0.75
  %v773 = vmul.f32 %v764, 1.5625
  %v774 = vsub.f32 %v772, %v773
  %v775 = vadd.f32 %v774, %v769
  %v776 = vld [vmem:[#allocation2 + $0x3] sm:$0x1]
  %v777 = vmul.f32 %v775, 0.01
  %v778 = vadd.f32 %v771, %v777
  %v779 = vmul.f32 %v775, 0.75
  %v780 = vmul.f32 %v771, 1.5625
  %v781 = vsub.f32 %v779, %v780
  %v782 = vadd.f32 %v781, %v776
  %v783 = vld [vmem:[#allocation2 + $0x4] sm:$0x1]
  %v784 = vmul.f32 %v782, 0.01
  %v785 = vadd.f32 %v778, %v784
  %v786 = vmul.f32 %v782, 0.75
  %v787 = vmul.f32 %v778, 1.5625
  %v788 = vsub.f32 %v786, %v787
  %v789 = vadd.f32 %v788, %v783
  %v790 = vld [vmem:[#allocation2 + $0x5] sm:$0x1]
  %v791 = vmul.f32 %v789, 0.01
  %v792 = vadd.f32 %v785, %v791
  %v793 = vmul.f32 %v789, 0.75
  %v794 = vmul.f32 %v785, 1.5625
  %v795 = vsub.f32 %v793, %v794
  %v796 = vadd.f32 %v795, %v790
  %v797 = vld [vmem:[#allocation2 + $0x6] sm:$0x1]
  %v798 = vmul.f32 %v796, 0.01
  %v799 = vadd.f32 %v792, %v798
  %v800 = vmul.f32 %v796, 0.75
  %v801 = vmul.f32 %v792, 1.5625
  %v802 = vsub.f32 %v800, %v801
  %v803 = vadd.f32 %v802, %v797
  %v805 = vlaneseq
  %v806 = vshrl.u32 %v805, 7
  %v807 = vsub.s32 0, %v806
  %v808 = vrot.slane %v758, %v807
  %v811 = vlaneseq
  %v812 = vshrl.u32 %v811, 7
  %v813 = vsub.s32 0, %v812
  %v814 = vrot.slane %v764, %v813
  %v817 = vlaneseq
  %v818 = vshrl.u32 %v817, 7
  %v819 = vsub.s32 0, %v818
  %v820 = vrot.slane %v771, %v819
  %v823 = vlaneseq
  %v824 = vshrl.u32 %v823, 7
  %v825 = vsub.s32 0, %v824
  %v826 = vrot.slane %v778, %v825
  %v829 = vlaneseq
  %v830 = vshrl.u32 %v829, 7
  %v831 = vsub.s32 0, %v830
  %v832 = vrot.slane %v785, %v831
  %v835 = vlaneseq
  %v836 = vshrl.u32 %v835, 7
  %v837 = vsub.s32 0, %v836
  %v838 = vrot.slane %v792, %v837
  %v841 = vlaneseq
  %v842 = vshrl.u32 %v841, 7
  %v843 = vsub.s32 0, %v842
  %v844 = vrot.slane %v799, %v843
  %vm846 = vcmask 1040384
  %v847 = vsel %vm846, %v513, %v808
  %vm848 = vcmask 1041408
  %v849 = vsel %vm848, %v847, %v814
  %vm850 = vcmask 1042432
  %v851 = vsel %vm850, %v849, %v820
  %vm852 = vcmask 1043456
  %v853 = vsel %vm852, %v851, %v826
  %v854 = vsel %vm569, %v853, %v832
  %vm855 = vcmask 1045504
  %v856 = vsel %vm855, %v854, %v838
  %vm857 = vcmask 1046528
  %v858 = vsel %vm857, %v856, %v844
  %859 = vst.msk [vmem:[%s5] sm:$0xff] %vm742, %v858
  loop: start=0, step=1, limit=11
  $region22: #{neuroscribe_forward.1} parent=0 // loop_pre_header
    _
  $region23: #{neuroscribe_forward.1} parent=0 // loop_header
    %s861 = sphi 0, %s865
    %p862 = scmp.ge.s32.totalorder %s861, 11
    %v866 = vphi %v799, %v971
    %v867 = vphi %v803, %v977
  $region24: #{neuroscribe_forward.1} parent=0 // loop_header_branch
    %864 = sbr.rel (%p862) target = $region28
  $region25: #{neuroscribe_forward.1} parent=0 // loop_body
    %s868 = smul.u32 %s861, 8
    %s869 = sadd.s32 %s868, 8
    %s870 = ssub.s32 %s869, 1
    %s871 = scalar_lea.vmem [#allocation2], %s870
    %v872 = vld [vmem:[%s871] sm:$0xff]
    %v873 = vmul.f32 %v867, 0.01
    %v874 = vadd.f32 %v866, %v873
    %v875 = vmul.f32 %v867, 0.75
    %v876 = vmul.f32 %v866, 1.5625
    %v877 = vsub.f32 %v875, %v876
    %v878 = vadd.f32 %v877, %v872
    %v879 = vmul.f32 %v878, 0.01
    %v880 = vadd.f32 %v874, %v879
    %v881 = vmul.f32 %v878, 0.75
    %v882 = vmul.f32 %v874, 1.5625
    %v883 = vsub.f32 %v881, %v882
    %v886 = vunpack.c.l.s4 1966171168
    %v887 = vunpack.c.0.s8 %v886
    %v888 = vlaneseq
    %v889 = vshrl.u32 %v888, 7
    %v890 = vsub.s32 %v887, %v889
    %v891 = vrot.slane %v872, %v890
    %v892 = vcombine.high %v891, %v891
    %v894 = vunpack.c.l.s4 1966171168
    %v895 = vunpack.c.0.s8 %v894
    %v896 = vlaneseq
    %v897 = vshrl.u32 %v896, 7
    %v898 = vsub.s32 %v895, %v897
    %v899 = vrot.slane %v891, %v898
    %v901 = vunpack.c.l.s4 1966171168
    %v902 = vunpack.c.0.s8 %v901
    %v903 = vlaneseq
    %v904 = vshrl.u32 %v903, 7
    %v905 = vsub.s32 %v902, %v904
    %v906 = vrot.slane %v892, %v905
    %v908 = vadd.f32 %v883, %v906
    %v909 = vmul.f32 %v908, 0.01
    %v910 = vadd.f32 %v880, %v909
    %v911 = vmul.f32 %v908, 0.75
    %v912 = vmul.f32 %v880, 1.5625
    %v913 = vsub.f32 %v911, %v912
    %v914 = vcombine.high %v899, %v899
    %v916 = vadd.f32 %v913, %v914
    %v917 = vmul.f32 %v916, 0.01
    %v918 = vadd.f32 %v910, %v917
    %v919 = vmul.f32 %v916, 0.75
    %v920 = vmul.f32 %v910, 1.5625
    %v921 = vsub.f32 %v919, %v920
    %v922 = vcombine.high %v906, %v906
    %v924 = vadd.f32 %v921, %v922
    %v925 = vmul.f32 %v924, 0.01
    %v926 = vadd.f32 %v918, %v925
    %v927 = vmul.f32 %v924, 0.75
    %v928 = vmul.f32 %v918, 1.5625
    %v929 = vsub.f32 %v927, %v928
    %v930 = vcombine.high %v872, %v872
    %v932 = vunpack.c.l.s4 1966171168
    %v933 = vunpack.c.0.s8 %v932
    %v934 = vlaneseq
    %v935 = vshrl.u32 %v934, 7
    %v936 = vsub.s32 %v933, %v935
    %v937 = vrot.slane %v930, %v936
    %v939 = vunpack.c.l.s4 1966171168
    %v940 = vunpack.c.0.s8 %v939
    %v941 = vlaneseq
    %v942 = vshrl.u32 %v941, 7
    %v943 = vsub.s32 %v940, %v942
    %v944 = vrot.slane %v937, %v943
    %v946 = vadd.f32 %v929, %v944
    %v947 = vmul.f32 %v946, 0.01
    %v948 = vadd.f32 %v926, %v947
    %v949 = vmul.f32 %v946, 0.75
    %v950 = vmul.f32 %v926, 1.5625
    %v951 = vsub.f32 %v949, %v950
    %v952 = vcombine.high %v937, %v937
    %v954 = vunpack.c.l.s4 1966171168
    %v955 = vunpack.c.0.s8 %v954
    %v956 = vlaneseq
    %v957 = vshrl.u32 %v956, 7
    %v958 = vsub.s32 %v955, %v957
    %v959 = vrot.slane %v952, %v958
    %v961 = vadd.f32 %v951, %v959
    %v962 = vmul.f32 %v961, 0.01
    %v963 = vadd.f32 %v948, %v962
    %v964 = vmul.f32 %v961, 0.75
    %v965 = vmul.f32 %v948, 1.5625
    %v966 = vsub.f32 %v964, %v965
    %v967 = vcombine.high %v944, %v944
    %v969 = vadd.f32 %v966, %v967
    %v970 = vmul.f32 %v969, 0.01
    %v971 = vadd.f32 %v963, %v970
    %v972 = vmul.f32 %v969, 0.75
    %v973 = vmul.f32 %v963, 1.5625
    %v974 = vsub.f32 %v972, %v973
    %v975 = vcombine.high %v959, %v959
    %v977 = vadd.f32 %v974, %v975
    %v979 = vlaneseq
    %v980 = vshrl.u32 %v979, 7
    %v981 = vsub.s32 0, %v980
    %v982 = vrot.slane %v880, %v981
    %v985 = vlaneseq
    %v986 = vshrl.u32 %v985, 7
    %v987 = vsub.s32 0, %v986
    %v988 = vrot.slane %v910, %v987
    %v991 = vlaneseq
    %v992 = vshrl.u32 %v991, 7
    %v993 = vsub.s32 0, %v992
    %v994 = vrot.slane %v918, %v993
    %v997 = vlaneseq
    %v998 = vshrl.u32 %v997, 7
    %v999 = vsub.s32 0, %v998
    %v1000 = vrot.slane %v926, %v999
    %v1003 = vlaneseq
    %v1004 = vshrl.u32 %v1003, 7
    %v1005 = vsub.s32 0, %v1004
    %v1006 = vrot.slane %v948, %v1005
    %v1009 = vlaneseq
    %v1010 = vshrl.u32 %v1009, 7
    %v1011 = vsub.s32 0, %v1010
    %v1012 = vrot.slane %v963, %v1011
    %v1015 = vlaneseq
    %v1016 = vshrl.u32 %v1015, 7
    %v1017 = vsub.s32 0, %v1016
    %v1018 = vrot.slane %v971, %v1017
    %v1020 = vsel %vm846, %v874, %v982
    %v1021 = vsel %vm848, %v1020, %v988
    %v1022 = vsel %vm850, %v1021, %v994
    %v1023 = vsel %vm852, %v1022, %v1000
    %v1024 = vsel %vm569, %v1023, %v1006
    %v1025 = vsel %vm855, %v1024, %v1012
    %v1026 = vsel %vm857, %v1025, %v1018
    %s1027 = scalar_lea.vmem %s5, %s869
    %1028 = vst.msk [vmem:[%s1027] sm:$0xff] %vm742, %v1026
  $region26: #{neuroscribe_forward.1} parent=0 // loop_footer
    %s865 = sadd.s32 1, %s861
  $region27: #{neuroscribe_forward.1} parent=0 // loop_footer_branch
    %860 = sbr.rel target = $region23
  $region28: #{neuroscribe_forward.1} parent=0 // loop_exit
    _
  %v1029 = vld [vmem:[#allocation2 + $0x5f] sm:$0x1]
  %v1030 = vmul.f32 %v867, 0.01
  %v1031 = vadd.f32 %v866, %v1030
  %v1032 = vmul.f32 %v867, 0.75
  %v1033 = vmul.f32 %v866, 1.5625
  %v1034 = vsub.f32 %v1032, %v1033
  %v1035 = vadd.f32 %v1034, %v1029
  %v1036 = vld [vmem:[#allocation2 + $0x60] sm:$0x1]
  %v1037 = vmul.f32 %v1035, 0.01
  %v1038 = vadd.f32 %v1031, %v1037
  %v1039 = vmul.f32 %v1035, 0.75
  %v1040 = vmul.f32 %v1031, 1.5625
  %v1041 = vsub.f32 %v1039, %v1040
  %v1042 = vadd.f32 %v1041, %v1036
  %v1043 = vld [vmem:[#allocation2 + $0x61] sm:$0x1]
  %v1044 = vmul.f32 %v1042, 0.01
  %v1045 = vadd.f32 %v1038, %v1044
  %v1046 = vmul.f32 %v1042, 0.75
  %v1047 = vmul.f32 %v1038, 1.5625
  %v1048 = vsub.f32 %v1046, %v1047
  %v1049 = vadd.f32 %v1048, %v1043
  %v1050 = vld [vmem:[#allocation2 + $0x62] sm:$0x1]
  %v1051 = vmul.f32 %v1049, 0.01
  %v1052 = vadd.f32 %v1045, %v1051
  %v1053 = vmul.f32 %v1049, 0.75
  %v1054 = vmul.f32 %v1045, 1.5625
  %v1055 = vsub.f32 %v1053, %v1054
  %v1056 = vadd.f32 %v1055, %v1050
  %v1057 = vmul.f32 %v1056, 0.01
  %v1058 = vadd.f32 %v1052, %v1057
  %v1060 = vlaneseq
  %v1061 = vshrl.u32 %v1060, 7
  %v1062 = vsub.s32 0, %v1061
  %v1063 = vrot.slane %v1038, %v1062
  %v1066 = vlaneseq
  %v1067 = vshrl.u32 %v1066, 7
  %v1068 = vsub.s32 0, %v1067
  %v1069 = vrot.slane %v1045, %v1068
  %v1072 = vlaneseq
  %v1073 = vshrl.u32 %v1072, 7
  %v1074 = vsub.s32 0, %v1073
  %v1075 = vrot.slane %v1052, %v1074
  %v1078 = vlaneseq
  %v1079 = vshrl.u32 %v1078, 7
  %v1080 = vsub.s32 0, %v1079
  %v1081 = vrot.slane %v1058, %v1080
  %v1083 = vsel %vm846, %v1031, %v1063
  %v1084 = vsel %vm848, %v1083, %v1069
  %v1085 = vsel %vm850, %v1084, %v1075
  %v1086 = vsel %vm852, %v1085, %v1081
  %vm1087 = vcmask 12288
  %1088 = vst.msk [vmem:[%s5 + $0x60] sm:$0x1f] %vm1087, %v1086
  // Predicated region
  $region29: #{neuroscribe_forward.1} parent=0 // pred_check
    _
  $region30: #{neuroscribe_forward.1} parent=0 // pred_check_branch
    %1090 = sbr.rel (0) target = $region32
  $region31: #{neuroscribe_forward.1} parent=0 // pred_region
    _
  $region32: #{neuroscribe_forward.1} parent=0 // pred_fallthru
    _
  // Predicated region
  $region33: #{neuroscribe_forward.1} parent=0 // pred_check
    _
  $region34: #{neuroscribe_forward.1} parent=0 // pred_check_branch
    %1092 = sbr.rel (0) target = $region36
  $region35: #{neuroscribe_forward.1} parent=0 // pred_region
    _
  $region36: #{neuroscribe_forward.1} parent=0 // pred_fallthru
    _

</llo_original>
